<compile_context>
chip_gen: v7x
topology: tpu7x:2x2x1
jax: 0.10.0
libtpu: 0.0.40
codegen_flags: <defaults>
</compile_context>

<pallas_src>
import jax
import jax.numpy as jnp
from jax import lax
from jax.experimental import pallas as pl
from jax.experimental.pallas import tpu as pltpu


def _fused_kernel(ids_ref, tt_ref, b1_ref, w2_ref, b2_ref, o_ref):
    """One batch tile; batch dim on lanes everywhere.

    ids_ref: (P, TB)     int32  token ids for this tile (batch on lanes)
    tt_ref:  (H, P*Vp)   bf16   folded Embedding+Linear1 table (VMEM resident)
    b1_ref:  (H, 1)      f32
    w2_ref:  (H, 1)      f32
    b2_ref:  (1, 1)      f32
    o_ref:   (1, TB)     f32    sigmoid output (lane-dense)
    """
    P, TB = ids_ref.shape
    H, K = tt_ref.shape
    Vp = K // P

    ids = ids_ref[...]                                             # (P, TB) int32

    # Multi-hot selection matrix for ALL positions at once:
    #   sel[p, v, b] = (ids[p, b] == v)   (0/1 exact in bf16).
    # Compare is done in int32 (v5e has no bf16 VALU); only the matmul operand
    # is narrowed to bf16.
    iota_v = lax.broadcasted_iota(jnp.int32, (Vp, TB), 0)          # (Vp, TB)
    sel = (iota_v[None, :, :] == ids[:, None, :]).astype(jnp.bfloat16)  # (P,Vp,TB)
    # Vp is a multiple of 128, so merging (P, Vp) into sublanes is layout-free.
    sel = sel.reshape(K, TB)                                       # (K, TB)

    # Single MXU matmul replaces 8 per-position K=100 dots:
    #   h_pre[h, b] = sum_{p} tt[h, p, ids[p, b]]
    acc = jnp.dot(tt_ref[...], sel,
                  preferred_element_type=jnp.float32)              # (H, TB) f32

    h = jnp.maximum(acc + b1_ref[...], 0.0)                        # bias + ReLU

    # Linear2 (H -> 1) as a sublane reduction (XLU) instead of a near-empty
    # MXU matmul.
    z = jnp.sum(h * w2_ref[...], axis=0, keepdims=True) + b2_ref[...]   # (1, TB)

    # Sigmoid: exp and approx reciprocal both land in the EUP slot.
    o_ref[...] = pl.reciprocal(1.0 + jnp.exp(-z), approx=True)


def _round_up(x, m):
    return (x + m - 1) // m * m


def binary_classifier_forward(token_ids, emb_table, w1, b1, w2, b2, max_len,
                              batch_tile=2048):
    """Mirrors BinaryClassifier.forward.

    token_ids: int array, any shape reshapeable to (-1, max_len)
    emb_table: (max_tokens, emb_dim) float32
    w1: (max_len*emb_dim, 32), b1: (32,)   (x @ W convention)
    w2: (32, 1),               b2: (1,)
    returns: (B, 1) float32 in (0, 1)
    """
    ids = token_ids.reshape(-1, max_len).astype(jnp.int32)      # x.view(-1, max_len)
    B = ids.shape[0]
    V, E = emb_table.shape
    H = w1.shape[1]
    P = max_len
    Vp = _round_up(V, 128)   # pad vocab so the in-kernel sublane merge is clean

    # Fold Embedding -> Flatten -> Linear1 (plain JAX, cost independent of B):
    #   tt[h, p, v] = sum_e emb[v, e] * w1[p*E + e, h]
    w1_r = w1.reshape(P, E, H).astype(jnp.float32)
    tt = jnp.einsum('ve,peh->hpv', emb_table.astype(jnp.float32), w1_r)  # (H, P, V)
    tt = jnp.pad(tt, ((0, 0), (0, 0), (0, Vp - V)))              # zero-pad vocab
    # bf16 table: 0/1 selection is exact, table rounding error (~2^-9 rel on
    # tiny values) stays far below the 2e-3 output tolerance; MXU runs native
    # single-pass bf16 instead of multi-pass f32.
    tt = tt.reshape(H, P * Vp).astype(jnp.bfloat16)              # (H, K)

    b1_col = b1.reshape(H, 1).astype(jnp.float32)
    w2_col = w2.reshape(H, 1).astype(jnp.float32)
    b2_11 = b2.reshape(1, 1).astype(jnp.float32)

    # Batch tiling: TB rows per grid step, batch dim mapped to lanes.
    # Always a multiple of 128 regardless of user-supplied batch_tile.
    TB = max(128, min(_round_up(batch_tile, 128), _round_up(B, 128)))
    n_blk = pl.cdiv(B, TB)
    B_pad = n_blk * TB

    ids_t = ids.T                                                # (P, B), batch on lanes
    if B_pad != B:
        # Pad with token id 0 (valid row); padded outputs are sliced off below.
        ids_t = jnp.pad(ids_t, ((0, 0), (0, B_pad - B)))

    out_row = pl.pallas_call(
        _fused_kernel,
        out_shape=jax.ShapeDtypeStruct((1, B_pad), jnp.float32),
        grid_spec=pltpu.PrefetchScalarGridSpec(
            num_scalar_prefetch=0,
            grid=(n_blk,),
            in_specs=[
                pl.BlockSpec((P, TB), lambda i: (0, i)),          # id tile (pipelined)
                pl.BlockSpec((H, P * Vp), lambda i: (0, 0)),      # folded table, resident
                pl.BlockSpec((H, 1), lambda i: (0, 0)),           # b1, resident
                pl.BlockSpec((H, 1), lambda i: (0, 0)),           # w2, resident
                pl.BlockSpec((1, 1), lambda i: (0, 0)),           # b2, resident
            ],
            out_specs=pl.BlockSpec((1, TB), lambda i: (0, i)),    # lane-dense output
        ),
        compiler_params=pltpu.CompilerParams(
            # "parallel" is safe on all generations; on v7x swap to
            # pltpu.CORE_PARALLEL if a profile shows only one TensorCore busy.
            dimension_semantics=("parallel",),
            # Headroom for the bf16 multi-hot temporaries at large batch tiles;
            # comfortably under v7x's 64 MiB physical VMEM.
            vmem_limit_bytes=48 * 1024 * 1024,
        ),
    )(ids_t, tt, b1_col, w2_col, b2_11)

    return out_row[0, :B].reshape(B, 1)


def _reference_forward(token_ids, emb_table, w1, b1, w2, b2, max_len):
    ids = token_ids.reshape(-1, max_len)
    x = emb_table[ids].reshape(ids.shape[0], -1)
    h = jnp.maximum(x @ w1 + b1, 0.0)
    return jax.nn.sigmoid(h @ w2 + b2)


if __name__ == "__main__":
    # Small shapes consistent with the module
    max_tokens, max_len, emb_dim, batch = 100, 8, 16, 2
    D = max_len * emb_dim  # 128

    key = jax.random.PRNGKey(0)
    k_ids, k_emb, k_w1, k_b1, k_w2, k_b2 = jax.random.split(key, 6)

    token_ids = jax.random.randint(k_ids, (batch, max_len), 0, max_tokens, dtype=jnp.int32)
    emb_table = jax.random.normal(k_emb, (max_tokens, emb_dim), dtype=jnp.float32) * 0.1
    w1 = jax.random.normal(k_w1, (D, 32), dtype=jnp.float32) * 0.05
    b1 = jax.random.normal(k_b1, (32,), dtype=jnp.float32) * 0.05
    w2 = jax.random.normal(k_w2, (32, 1), dtype=jnp.float32) * 0.05
    b2 = jax.random.normal(k_b2, (1,), dtype=jnp.float32) * 0.05

    out = binary_classifier_forward(token_ids, emb_table, w1, b1, w2, b2, max_len)
    out = jax.block_until_ready(out)

    ref = _reference_forward(token_ids, emb_table, w1, b1, w2, b2, max_len)
    assert out.shape == (batch, 1), out.shape
    # Tolerance covers the approx-EUP reciprocal (~2^-12 rel) and the bf16
    # folded table / bf16 selection matmul.
    assert jnp.allclose(out, ref, atol=2e-3, rtol=2e-3), (out, ref)
    print("KERNEL_OK")
</pallas_src>

<mosaic_0001>
module attributes {stable_mosaic.version = 11 : i64} {
  func.func @_fused_kernel(%arg0: i32, %arg1: memref<8x128xi32, #tpu.memory_space<vmem>>, %arg2: memref<32x1024xbf16, #tpu.memory_space<vmem>>, %arg3: memref<32x1xf32, #tpu.memory_space<vmem>>, %arg4: memref<32x1xf32, #tpu.memory_space<vmem>>, %arg5: memref<1x1xf32, #tpu.memory_space<vmem>>, %arg6: memref<1x128xf32, #tpu.memory_space<vmem>>) attributes {dimension_semantics = [#tpu.dimension_semantics<parallel>], iteration_bounds = array<i64: 1>, scalar_prefetch = 0 : i64, scratch_operands = 0 : i64, tpu.core_type = #tpu.core_type<tc>, window_params = [{transform_indices = @transform_0, window_bounds = array<i64: 8, 128>}, {pipeline_mode = #tpu.pipeline_mode<synchronous>, transform_indices = @transform_1, window_bounds = array<i64: 32, 1024>}, {pipeline_mode = #tpu.pipeline_mode<synchronous>, transform_indices = @transform_2, window_bounds = array<i64: 32, 1>}, {pipeline_mode = #tpu.pipeline_mode<synchronous>, transform_indices = @transform_3, window_bounds = array<i64: 32, 1>}, {pipeline_mode = #tpu.pipeline_mode<synchronous>, transform_indices = @transform_4, window_bounds = array<i64: 1, 1>}, {transform_indices = @transform_5, window_bounds = array<i64: 1, 128>}]} {
    %c0 = arith.constant 0 : index
    %c0_0 = arith.constant 0 : index
    %0 = vector.load %arg1[%c0, %c0_0] : memref<8x128xi32, #tpu.memory_space<vmem>>, vector<8x128xi32>
    %1 = tpu.iota {dimensions = array<i32: 0>} : vector<128x128xi32>
    %2 = vector.shape_cast %1 : vector<128x128xi32> to vector<1x128x128xi32>
    %3 = vector.shape_cast %0 : vector<8x128xi32> to vector<8x1x128xi32>
    %4 = vector.broadcast %2 : vector<1x128x128xi32> to vector<8x128x128xi32>
    %5 = vector.broadcast %3 : vector<8x1x128xi32> to vector<8x128x128xi32>
    %6 = arith.cmpi eq, %4, %5 : vector<8x128x128xi32>
    %7 = arith.extui %6 : vector<8x128x128xi1> to vector<8x128x128xi32>
    %8 = arith.sitofp %7 : vector<8x128x128xi32> to vector<8x128x128xf32>
    %9 = arith.truncf %8 : vector<8x128x128xf32> to vector<8x128x128xbf16>
    %10 = vector.shape_cast %9 : vector<8x128x128xbf16> to vector<1024x128xbf16>
    %c0_1 = arith.constant 0 : index
    %c0_2 = arith.constant 0 : index
    %11 = vector.load %arg2[%c0_1, %c0_2] : memref<32x1024xbf16, #tpu.memory_space<vmem>>, vector<32x1024xbf16>
    %cst = arith.constant dense<0.000000e+00> : vector<32x128xf32>
    %12 = tpu.matmul %11, %10, %cst {dimension_numbers = #tpu.dot_dimension_numbers<[1], [0], [0], [1], [0, 0, 1, 1], [], []>} : vector<32x1024xbf16>, vector<1024x128xbf16>, vector<32x128xf32> -> vector<32x128xf32>
    %c0_3 = arith.constant 0 : index
    %c0_4 = arith.constant 0 : index
    %13 = vector.load %arg3[%c0_3, %c0_4] : memref<32x1xf32, #tpu.memory_space<vmem>>, vector<32x1xf32>
    %14 = vector.broadcast %13 : vector<32x1xf32> to vector<32x128xf32>
    %15 = arith.addf %12, %14 : vector<32x128xf32>
    %cst_5 = arith.constant 0.000000e+00 : f32
    %16 = vector.broadcast %cst_5 : f32 to vector<32x128xf32>
    %17 = arith.maximumf %15, %16 : vector<32x128xf32>
    %c0_6 = arith.constant 0 : index
    %c0_7 = arith.constant 0 : index
    %18 = vector.load %arg4[%c0_6, %c0_7] : memref<32x1xf32, #tpu.memory_space<vmem>>, vector<32x1xf32>
    %19 = vector.broadcast %18 : vector<32x1xf32> to vector<32x128xf32>
    %20 = arith.mulf %17, %19 : vector<32x128xf32>
    %cst_8 = arith.constant dense<0.000000e+00> : vector<128xf32>
    %21 = vector.multi_reduction <add>, %20, %cst_8 [0] : vector<32x128xf32> to vector<128xf32>
    %22 = vector.shape_cast %21 : vector<128xf32> to vector<1x128xf32>
    %c0_9 = arith.constant 0 : index
    %c0_10 = arith.constant 0 : index
    %23 = vector.load %arg5[%c0_9, %c0_10] : memref<1x1xf32, #tpu.memory_space<vmem>>, vector<1x1xf32>
    %24 = vector.broadcast %23 : vector<1x1xf32> to vector<1x128xf32>
    %25 = arith.addf %22, %24 : vector<1x128xf32>
    %cst_11 = arith.constant 0.000000e+00 : f32
    %26 = vector.broadcast %cst_11 : f32 to vector<1x128xf32>
    %27 = arith.subf %26, %25 : vector<1x128xf32>
    %28 = math.exp %27 : vector<1x128xf32>
    %cst_12 = arith.constant 1.000000e+00 : f32
    %29 = vector.broadcast %cst_12 : f32 to vector<1x128xf32>
    %30 = arith.addf %29, %28 : vector<1x128xf32>
    %31 = tpu.reciprocal %30 {approx = true} : vector<1x128xf32> -> vector<1x128xf32>
    %c0_13 = arith.constant 0 : index
    %c0_14 = arith.constant 0 : index
    %32 = vector.load %arg6[%c0_13, %c0_14] : memref<1x128xf32, #tpu.memory_space<vmem>>, vector<1x128xf32>
    tpu.vector_store %arg6[%c0_13, %c0_14], %31 {strides = array<i32>} : memref<1x128xf32, #tpu.memory_space<vmem>>, vector<1x128xf32>,
    return
  }
  func.func @transform_0(%arg0: i32) -> (i32, i32) {
    %c0_i32 = arith.constant 0 : i32
    %c0_i32_0 = arith.constant 0 : i32
    return %c0_i32, %arg0 : i32, i32
  }
  func.func @transform_1(%arg0: i32) -> (i32, i32) {
    %c0_i32 = arith.constant 0 : i32
    %c0_i32_0 = arith.constant 0 : i32
    %c0_i32_1 = arith.constant 0 : i32
    return %c0_i32, %c0_i32_0 : i32, i32
  }
  func.func @transform_2(%arg0: i32) -> (i32, i32) {
    %c0_i32 = arith.constant 0 : i32
    %c0_i32_0 = arith.constant 0 : i32
    %c0_i32_1 = arith.constant 0 : i32
    return %c0_i32, %c0_i32_0 : i32, i32
  }
  func.func @transform_3(%arg0: i32) -> (i32, i32) {
    %c0_i32 = arith.constant 0 : i32
    %c0_i32_0 = arith.constant 0 : i32
    %c0_i32_1 = arith.constant 0 : i32
    return %c0_i32, %c0_i32_0 : i32, i32
  }
  func.func @transform_4(%arg0: i32) -> (i32, i32) {
    %c0_i32 = arith.constant 0 : i32
    %c0_i32_0 = arith.constant 0 : i32
    %c0_i32_1 = arith.constant 0 : i32
    return %c0_i32, %c0_i32_0 : i32, i32
  }
  func.func @transform_5(%arg0: i32) -> (i32, i32) {
    %c0_i32 = arith.constant 0 : i32
    %c0_i32_0 = arith.constant 0 : i32
    return %c0_i32, %arg0 : i32, i32
  }
}

</mosaic_0001>

<llo_original>
// kernel: tpu_custom_call.1
$region0: #{tpu_custom_call.1}
  #allocation0 [shape = 'u32[]', space=smem, size = 0x4, offset = 0x4, fixed_abs, tag = 'smem constant byte address 0x4 - core index']
  #allocation1 [shape = 'u32[144,128]{1,0:T(1,128)}', space=vmem, size = 0x12000, scoped, tag = 'internal scratch']
  #allocation2 [shape = 'f32[1,1]{1,0:T(1,128)S(1)}', space=vmem, size = 0x200, scoped, tag = 'scoped memory for tpu_custom_call.1']
  %s0 = inlined_call_operand.vmem [shape: s32[8,128], index: 0, kind: input, shape index: {}]
  %s1 = inlined_call_operand.hbm [shape: bf16[32,1024], index: 1, kind: input, shape index: {}]
  %s2 = inlined_call_operand.vmem [shape: f32[32,1], index: 2, kind: input, shape index: {}]
  %s3 = inlined_call_operand.vmem [shape: f32[32,1], index: 3, kind: input, shape index: {}]
  %s4 = inlined_call_operand.<no memory space> [shape: f32[1,1], index: 4, kind: input, shape index: {}]
  %s5 = inlined_call_operand.hbm [shape: f32[1,128], index: 5, kind: output, shape index: {}]
  %s6 = sld [smem:[#allocation0]]
  $region34: #{tpu_custom_call.1} parent=0
    _
  %s8 = ssub.s32 1, %s6
  %s9 = scalar_select 0, %s8, %s6
  %v10 = vstv %s4
  %11 = vst [vmem:[#allocation2] sm:$0x1] %v10
  $region1: #{tpu_custom_call.1} parent=0
    #allocation3 [shape = 'u8[65536]{0}', space=vmem, size = 0x10000, scoped, tag = 'input window, operand 1, single buffered']
    #allocation4 [shape = 's32[1]{0}', space=sflag, size = 0x4, scoped, tag = 'scoped memory for tpu_custom_call.1']
    #allocation5 [shape = 's32[1]{0}', space=sflag, size = 0x4, scoped, tag = 'scoped memory for tpu_custom_call.1']
    #allocation6 [shape = 'u8[512]{0}', space=vmem, size = 0x400, scoped, tag = 'output window, operand 0, single buffered']
    %12 = vsyncpa [#allocation4], 0
    %13 = vsyncpa [#allocation5], 0
    // Predicated region
    $region2: #{tpu_custom_call.1} parent=1 // pred_check
      _
    $region3: #{tpu_custom_call.1} parent=1 // pred_check_branch
      %15 = sbr.rel (0) target = $region5
    $region4: #{tpu_custom_call.1} parent=1 // pred_region
      _
    $region5: #{tpu_custom_call.1} parent=1 // pred_fallthru
      _
    // Predicated region
    $region6: #{tpu_custom_call.1} parent=1 // pred_check
      _
    $region7: #{tpu_custom_call.1} parent=1 // pred_check_branch
      %17 = sbr.rel (0) target = $region9
    $region8: #{tpu_custom_call.1} parent=1 // pred_region
      %s19 = ssub.s32 2048, 2048
      %20 = vsyncadd [#allocation4], %s19
      %s21 = sshll.u32 [#allocation3], 4
      %s22 = int_to_ptr.vmem [resolvable:$true] %s21
      %27 = dma.hbm_to_vmem [thread:$0]  %s1, 2048, %s22, [#allocation4], 512, 512, 32
    $region9: #{tpu_custom_call.1} parent=1 // pred_fallthru
      _
    // Predicated region
    $region10: #{tpu_custom_call.1} parent=1 // pred_check
      _
    $region11: #{tpu_custom_call.1} parent=1 // pred_check_branch
      %29 = sbr.rel (0) target = $region13
    $region12: #{tpu_custom_call.1} parent=1 // pred_region
      _
    $region13: #{tpu_custom_call.1} parent=1 // pred_fallthru
      _
    // Predicated region
    $region14: #{tpu_custom_call.1} parent=1 // pred_check
      _
    $region15: #{tpu_custom_call.1} parent=1 // pred_check_branch
      %31 = sbr.rel (0) target = $region17
    $region16: #{tpu_custom_call.1} parent=1 // pred_region
      _
    $region17: #{tpu_custom_call.1} parent=1 // pred_fallthru
      _
    // Predicated region
    $region18: #{tpu_custom_call.1} parent=1 // pred_check
      _
    $region19: #{tpu_custom_call.1} parent=1 // pred_check_branch
      %33 = sbr.rel (0) target = $region21
    $region20: #{tpu_custom_call.1} parent=1 // pred_region
      _
    $region21: #{tpu_custom_call.1} parent=1 // pred_fallthru
      _
    // Predicated region
    $region22: #{tpu_custom_call.1} parent=1 // pred_check
      _
    $region23: #{tpu_custom_call.1} parent=1 // pred_check_branch
      %35 = sbr.rel (0) target = $region25
    $region24: #{tpu_custom_call.1} parent=1 // pred_region
      %36 = dma.done [#allocation4], 2048
    $region25: #{tpu_custom_call.1} parent=1 // pred_fallthru
      _
    %v38 = vld [vmem:[%s0] sm:$0xff]
    %v39 = vlaneseq
    %v40 = vshrl.u32 %v39, 7
    %v41 = vadd.s32 %v40, 8
    %v42 = vadd.s32 %v40, 16
    %v43 = vadd.s32 %v40, 24
    %v44 = vadd.s32 %v40, 32
    %v45 = vadd.s32 %v40, 40
    %v46 = vadd.s32 %v40, 48
    %v47 = vadd.s32 %v40, 56
    %v48 = vadd.s32 %v40, 64
    %v49 = vadd.s32 %v40, 72
    %v50 = vadd.s32 %v40, 80
    %v51 = vadd.s32 %v40, 88
    %v52 = vadd.s32 %v40, 96
    %v53 = vadd.s32 %v40, 104
    %v54 = vadd.s32 %v40, 112
    %v55 = vadd.s32 %v40, 120
    %v56 = vcombine.high %v38, %v38
    %v58 = vunpack.c.l.s4 1966171168
    %v59 = vunpack.c.0.s8 %v58
    %v60 = vlaneseq
    %v61 = vshrl.u32 %v60, 7
    %v62 = vsub.s32 %v59, %v61
    %v63 = vrot.slane %v38, %v62
    %v65 = vunpack.c.l.s4 1966171168
    %v66 = vunpack.c.0.s8 %v65
    %v67 = vlaneseq
    %v68 = vshrl.u32 %v67, 7
    %v69 = vsub.s32 %v66, %v68
    %v70 = vrot.slane %v56, %v69
    %v71 = vcombine.high %v63, %v63
    %v72 = vcombine.high %v70, %v70
    %v74 = vunpack.c.l.s4 1966171168
    %v75 = vunpack.c.0.s8 %v74
    %v76 = vlaneseq
    %v77 = vshrl.u32 %v76, 7
    %v78 = vsub.s32 %v75, %v77
    %v79 = vrot.slane %v63, %v78
    %v81 = vunpack.c.l.s4 1966171168
    %v82 = vunpack.c.0.s8 %v81
    %v83 = vlaneseq
    %v84 = vshrl.u32 %v83, 7
    %v85 = vsub.s32 %v82, %v84
    %v86 = vrot.slane %v70, %v85
    %v88 = vunpack.c.l.s4 1966171168
    %v89 = vunpack.c.0.s8 %v88
    %v90 = vlaneseq
    %v91 = vshrl.u32 %v90, 7
    %v92 = vsub.s32 %v89, %v91
    %v93 = vrot.slane %v71, %v92
    %v95 = vunpack.c.l.s4 1966171168
    %v96 = vunpack.c.0.s8 %v95
    %v97 = vlaneseq
    %v98 = vshrl.u32 %v97, 7
    %v99 = vsub.s32 %v96, %v98
    %v100 = vrot.slane %v72, %v99
    %v101 = vcombine.high %v79, %v79
    %v102 = vcombine.high %v86, %v86
    %v103 = vcombine.high %v93, %v93
    %v104 = vcombine.high %v100, %v100
    %v105 = vlaneseq
    %v106 = vshrl.u32 %v105, 7
    %v107 = vsub.s32 0, %v106
    %v108 = vrot.slane %v79, %v107
    %v109 = vlaneseq
    %v110 = vshrl.u32 %v109, 7
    %v111 = vsub.s32 0, %v110
    %v112 = vrot.slane %v93, %v111
    %v113 = vlaneseq
    %v114 = vshrl.u32 %v113, 7
    %v115 = vsub.s32 0, %v114
    %v116 = vrot.slane %v101, %v115
    %v117 = vlaneseq
    %v118 = vshrl.u32 %v117, 7
    %v119 = vsub.s32 0, %v118
    %v120 = vrot.slane %v103, %v119
    %v121 = vlaneseq
    %v122 = vshrl.u32 %v121, 7
    %v123 = vsub.s32 0, %v122
    %v124 = vrot.slane %v86, %v123
    %v125 = vlaneseq
    %v126 = vshrl.u32 %v125, 7
    %v127 = vsub.s32 0, %v126
    %v128 = vrot.slane %v100, %v127
    %v129 = vlaneseq
    %v130 = vshrl.u32 %v129, 7
    %v131 = vsub.s32 0, %v130
    %v132 = vrot.slane %v102, %v131
    %v133 = vlaneseq
    %v134 = vshrl.u32 %v133, 7
    %v135 = vsub.s32 0, %v134
    %v136 = vrot.slane %v104, %v135
    %vm137 = vcmp.eq.s32.totalorder %v40, %v108
    %vm138 = vcmp.eq.s32.totalorder %v41, %v108
    %vm139 = vcmp.eq.s32.totalorder %v42, %v108
    %vm140 = vcmp.eq.s32.totalorder %v43, %v108
    %vm141 = vcmp.eq.s32.totalorder %v44, %v108
    %vm142 = vcmp.eq.s32.totalorder %v45, %v108
    %vm143 = vcmp.eq.s32.totalorder %v46, %v108
    %vm144 = vcmp.eq.s32.totalorder %v47, %v108
    %vm145 = vcmp.eq.s32.totalorder %v48, %v108
    %vm146 = vcmp.eq.s32.totalorder %v49, %v108
    %vm147 = vcmp.eq.s32.totalorder %v50, %v108
    %vm148 = vcmp.eq.s32.totalorder %v51, %v108
    %vm149 = vcmp.eq.s32.totalorder %v52, %v108
    %vm150 = vcmp.eq.s32.totalorder %v53, %v108
    %vm151 = vcmp.eq.s32.totalorder %v54, %v108
    %vm152 = vcmp.eq.s32.totalorder %v55, %v108
    %vm153 = vcmp.eq.s32.totalorder %v40, %v112
    %vm154 = vcmp.eq.s32.totalorder %v41, %v112
    %vm155 = vcmp.eq.s32.totalorder %v42, %v112
    %vm156 = vcmp.eq.s32.totalorder %v43, %v112
    %vm157 = vcmp.eq.s32.totalorder %v44, %v112
    %vm158 = vcmp.eq.s32.totalorder %v45, %v112
    %vm159 = vcmp.eq.s32.totalorder %v46, %v112
    %vm160 = vcmp.eq.s32.totalorder %v47, %v112
    %vm161 = vcmp.eq.s32.totalorder %v48, %v112
    %vm162 = vcmp.eq.s32.totalorder %v49, %v112
    %vm163 = vcmp.eq.s32.totalorder %v50, %v112
    %vm164 = vcmp.eq.s32.totalorder %v51, %v112
    %vm165 = vcmp.eq.s32.totalorder %v52, %v112
    %vm166 = vcmp.eq.s32.totalorder %v53, %v112
    %vm167 = vcmp.eq.s32.totalorder %v54, %v112
    %vm168 = vcmp.eq.s32.totalorder %v55, %v112
    %vm169 = vcmp.eq.s32.totalorder %v40, %v116
    %vm170 = vcmp.eq.s32.totalorder %v41, %v116
    %vm171 = vcmp.eq.s32.totalorder %v42, %v116
    %vm172 = vcmp.eq.s32.totalorder %v43, %v116
    %vm173 = vcmp.eq.s32.totalorder %v44, %v116
    %vm174 = vcmp.eq.s32.totalorder %v45, %v116
    %vm175 = vcmp.eq.s32.totalorder %v46, %v116
    %vm176 = vcmp.eq.s32.totalorder %v47, %v116
    %vm177 = vcmp.eq.s32.totalorder %v48, %v116
    %vm178 = vcmp.eq.s32.totalorder %v49, %v116
    %vm179 = vcmp.eq.s32.totalorder %v50, %v116
    %vm180 = vcmp.eq.s32.totalorder %v51, %v116
    %vm181 = vcmp.eq.s32.totalorder %v52, %v116
    %vm182 = vcmp.eq.s32.totalorder %v53, %v116
    %vm183 = vcmp.eq.s32.totalorder %v54, %v116
    %vm184 = vcmp.eq.s32.totalorder %v55, %v116
    %vm185 = vcmp.eq.s32.totalorder %v40, %v120
    %vm186 = vcmp.eq.s32.totalorder %v41, %v120
    %vm187 = vcmp.eq.s32.totalorder %v42, %v120
    %vm188 = vcmp.eq.s32.totalorder %v43, %v120
    %vm189 = vcmp.eq.s32.totalorder %v44, %v120
    %vm190 = vcmp.eq.s32.totalorder %v45, %v120
    %vm191 = vcmp.eq.s32.totalorder %v46, %v120
    %vm192 = vcmp.eq.s32.totalorder %v47, %v120
    %vm193 = vcmp.eq.s32.totalorder %v48, %v120
    %vm194 = vcmp.eq.s32.totalorder %v49, %v120
    %vm195 = vcmp.eq.s32.totalorder %v50, %v120
    %vm196 = vcmp.eq.s32.totalorder %v51, %v120
    %vm197 = vcmp.eq.s32.totalorder %v52, %v120
    %vm198 = vcmp.eq.s32.totalorder %v53, %v120
    %vm199 = vcmp.eq.s32.totalorder %v54, %v120
    %vm200 = vcmp.eq.s32.totalorder %v55, %v120
    %vm201 = vcmp.eq.s32.totalorder %v40, %v124
    %vm202 = vcmp.eq.s32.totalorder %v41, %v124
    %vm203 = vcmp.eq.s32.totalorder %v42, %v124
    %vm204 = vcmp.eq.s32.totalorder %v43, %v124
    %vm205 = vcmp.eq.s32.totalorder %v44, %v124
    %vm206 = vcmp.eq.s32.totalorder %v45, %v124
    %vm207 = vcmp.eq.s32.totalorder %v46, %v124
    %vm208 = vcmp.eq.s32.totalorder %v47, %v124
    %vm209 = vcmp.eq.s32.totalorder %v48, %v124
    %vm210 = vcmp.eq.s32.totalorder %v49, %v124
    %vm211 = vcmp.eq.s32.totalorder %v50, %v124
    %vm212 = vcmp.eq.s32.totalorder %v51, %v124
    %vm213 = vcmp.eq.s32.totalorder %v52, %v124
    %vm214 = vcmp.eq.s32.totalorder %v53, %v124
    %vm215 = vcmp.eq.s32.totalorder %v54, %v124
    %vm216 = vcmp.eq.s32.totalorder %v55, %v124
    %vm217 = vcmp.eq.s32.totalorder %v40, %v128
    %vm218 = vcmp.eq.s32.totalorder %v41, %v128
    %vm219 = vcmp.eq.s32.totalorder %v42, %v128
    %vm220 = vcmp.eq.s32.totalorder %v43, %v128
    %vm221 = vcmp.eq.s32.totalorder %v44, %v128
    %vm222 = vcmp.eq.s32.totalorder %v45, %v128
    %vm223 = vcmp.eq.s32.totalorder %v46, %v128
    %vm224 = vcmp.eq.s32.totalorder %v47, %v128
    %vm225 = vcmp.eq.s32.totalorder %v48, %v128
    %vm226 = vcmp.eq.s32.totalorder %v49, %v128
    %vm227 = vcmp.eq.s32.totalorder %v50, %v128
    %vm228 = vcmp.eq.s32.totalorder %v51, %v128
    %vm229 = vcmp.eq.s32.totalorder %v52, %v128
    %vm230 = vcmp.eq.s32.totalorder %v53, %v128
    %vm231 = vcmp.eq.s32.totalorder %v54, %v128
    %vm232 = vcmp.eq.s32.totalorder %v55, %v128
    %vm233 = vcmp.eq.s32.totalorder %v40, %v132
    %vm234 = vcmp.eq.s32.totalorder %v41, %v132
    %vm235 = vcmp.eq.s32.totalorder %v42, %v132
    %vm236 = vcmp.eq.s32.totalorder %v43, %v132
    %vm237 = vcmp.eq.s32.totalorder %v44, %v132
    %vm238 = vcmp.eq.s32.totalorder %v45, %v132
    %vm239 = vcmp.eq.s32.totalorder %v46, %v132
    %vm240 = vcmp.eq.s32.totalorder %v47, %v132
    %vm241 = vcmp.eq.s32.totalorder %v48, %v132
    %vm242 = vcmp.eq.s32.totalorder %v49, %v132
    %vm243 = vcmp.eq.s32.totalorder %v50, %v132
    %vm244 = vcmp.eq.s32.totalorder %v51, %v132
    %vm245 = vcmp.eq.s32.totalorder %v52, %v132
    %vm246 = vcmp.eq.s32.totalorder %v53, %v132
    %vm247 = vcmp.eq.s32.totalorder %v54, %v132
    %vm248 = vcmp.eq.s32.totalorder %v55, %v132
    %vm249 = vcmp.eq.s32.totalorder %v40, %v136
    %vm250 = vcmp.eq.s32.totalorder %v41, %v136
    %vm251 = vcmp.eq.s32.totalorder %v42, %v136
    %vm252 = vcmp.eq.s32.totalorder %v43, %v136
    %vm253 = vcmp.eq.s32.totalorder %v44, %v136
    %vm254 = vcmp.eq.s32.totalorder %v45, %v136
    %vm255 = vcmp.eq.s32.totalorder %v46, %v136
    %vm256 = vcmp.eq.s32.totalorder %v47, %v136
    %vm257 = vcmp.eq.s32.totalorder %v48, %v136
    %vm258 = vcmp.eq.s32.totalorder %v49, %v136
    %vm259 = vcmp.eq.s32.totalorder %v50, %v136
    %vm260 = vcmp.eq.s32.totalorder %v51, %v136
    %vm261 = vcmp.eq.s32.totalorder %v52, %v136
    %vm262 = vcmp.eq.s32.totalorder %v53, %v136
    %vm263 = vcmp.eq.s32.totalorder %v54, %v136
    %vm264 = vcmp.eq.s32.totalorder %v55, %v136
    %v265 = vsel %vm137, 1, 0
    %v266 = vsel %vm138, 1, 0
    %v267 = vsel %vm139, 1, 0
    %v268 = vsel %vm140, 1, 0
    %v269 = vsel %vm141, 1, 0
    %v270 = vsel %vm142, 1, 0
    %v271 = vsel %vm143, 1, 0
    %v272 = vsel %vm144, 1, 0
    %v273 = vsel %vm145, 1, 0
    %v274 = vsel %vm146, 1, 0
    %v275 = vsel %vm147, 1, 0
    %v276 = vsel %vm148, 1, 0
    %v277 = vsel %vm149, 1, 0
    %v278 = vsel %vm150, 1, 0
    %v279 = vsel %vm151, 1, 0
    %v280 = vsel %vm152, 1, 0
    %v281 = vsel %vm153, 1, 0
    %v282 = vsel %vm154, 1, 0
    %v283 = vsel %vm155, 1, 0
    %v284 = vsel %vm156, 1, 0
    %v285 = vsel %vm157, 1, 0
    %v286 = vsel %vm158, 1, 0
    %v287 = vsel %vm159, 1, 0
    %v288 = vsel %vm160, 1, 0
    %v289 = vsel %vm161, 1, 0
    %v290 = vsel %vm162, 1, 0
    %v291 = vsel %vm163, 1, 0
    %v292 = vsel %vm164, 1, 0
    %v293 = vsel %vm165, 1, 0
    %v294 = vsel %vm166, 1, 0
    %v295 = vsel %vm167, 1, 0
    %v296 = vsel %vm168, 1, 0
    %v297 = vsel %vm169, 1, 0
    %v298 = vsel %vm170, 1, 0
    %v299 = vsel %vm171, 1, 0
    %v300 = vsel %vm172, 1, 0
    %v301 = vsel %vm173, 1, 0
    %v302 = vsel %vm174, 1, 0
    %v303 = vsel %vm175, 1, 0
    %v304 = vsel %vm176, 1, 0
    %v305 = vsel %vm177, 1, 0
    %v306 = vsel %vm178, 1, 0
    %v307 = vsel %vm179, 1, 0
    %v308 = vsel %vm180, 1, 0
    %v309 = vsel %vm181, 1, 0
    %v310 = vsel %vm182, 1, 0
    %v311 = vsel %vm183, 1, 0
    %v312 = vsel %vm184, 1, 0
    %v313 = vsel %vm185, 1, 0
    %v314 = vsel %vm186, 1, 0
    %v315 = vsel %vm187, 1, 0
    %v316 = vsel %vm188, 1, 0
    %v317 = vsel %vm189, 1, 0
    %v318 = vsel %vm190, 1, 0
    %v319 = vsel %vm191, 1, 0
    %v320 = vsel %vm192, 1, 0
    %v321 = vsel %vm193, 1, 0
    %v322 = vsel %vm194, 1, 0
    %v323 = vsel %vm195, 1, 0
    %v324 = vsel %vm196, 1, 0
    %v325 = vsel %vm197, 1, 0
    %v326 = vsel %vm198, 1, 0
    %v327 = vsel %vm199, 1, 0
    %v328 = vsel %vm200, 1, 0
    %v329 = vsel %vm201, 1, 0
    %v330 = vsel %vm202, 1, 0
    %v331 = vsel %vm203, 1, 0
    %v332 = vsel %vm204, 1, 0
    %v333 = vsel %vm205, 1, 0
    %v334 = vsel %vm206, 1, 0
    %v335 = vsel %vm207, 1, 0
    %v336 = vsel %vm208, 1, 0
    %v337 = vsel %vm209, 1, 0
    %v338 = vsel %vm210, 1, 0
    %v339 = vsel %vm211, 1, 0
    %v340 = vsel %vm212, 1, 0
    %v341 = vsel %vm213, 1, 0
    %v342 = vsel %vm214, 1, 0
    %v343 = vsel %vm215, 1, 0
    %v344 = vsel %vm216, 1, 0
    %v345 = vsel %vm217, 1, 0
    %v346 = vsel %vm218, 1, 0
    %v347 = vsel %vm219, 1, 0
    %v348 = vsel %vm220, 1, 0
    %v349 = vsel %vm221, 1, 0
    %v350 = vsel %vm222, 1, 0
    %v351 = vsel %vm223, 1, 0
    %v352 = vsel %vm224, 1, 0
    %v353 = vsel %vm225, 1, 0
    %v354 = vsel %vm226, 1, 0
    %v355 = vsel %vm227, 1, 0
    %v356 = vsel %vm228, 1, 0
    %v357 = vsel %vm229, 1, 0
    %v358 = vsel %vm230, 1, 0
    %v359 = vsel %vm231, 1, 0
    %v360 = vsel %vm232, 1, 0
    %v361 = vsel %vm233, 1, 0
    %v362 = vsel %vm234, 1, 0
    %v363 = vsel %vm235, 1, 0
    %v364 = vsel %vm236, 1, 0
    %v365 = vsel %vm237, 1, 0
    %v366 = vsel %vm238, 1, 0
    %v367 = vsel %vm239, 1, 0
    %v368 = vsel %vm240, 1, 0
    %v369 = vsel %vm241, 1, 0
    %v370 = vsel %vm242, 1, 0
    %v371 = vsel %vm243, 1, 0
    %v372 = vsel %vm244, 1, 0
    %v373 = vsel %vm245, 1, 0
    %v374 = vsel %vm246, 1, 0
    %v375 = vsel %vm247, 1, 0
    %v376 = vsel %vm248, 1, 0
    %v377 = vsel %vm249, 1, 0
    %v378 = vsel %vm250, 1, 0
    %v379 = vsel %vm251, 1, 0
    %v380 = vsel %vm252, 1, 0
    %v381 = vsel %vm253, 1, 0
    %v382 = vsel %vm254, 1, 0
    %v383 = vsel %vm255, 1, 0
    %v384 = vsel %vm256, 1, 0
    %v385 = vsel %vm257, 1, 0
    %v386 = vsel %vm258, 1, 0
    %v387 = vsel %vm259, 1, 0
    %v388 = vsel %vm260, 1, 0
    %v389 = vsel %vm261, 1, 0
    %v390 = vsel %vm262, 1, 0
    %v391 = vsel %vm263, 1, 0
    %v392 = vsel %vm264, 1, 0
    %v393 = vcvt.s32.f32 %v265
    %v394 = vcvt.s32.f32 %v266
    %v395 = vcvt.s32.f32 %v267
    %v396 = vcvt.s32.f32 %v268
    %v397 = vcvt.s32.f32 %v269
    %v398 = vcvt.s32.f32 %v270
    %v399 = vcvt.s32.f32 %v271
    %v400 = vcvt.s32.f32 %v272
    %v401 = vcvt.s32.f32 %v273
    %v402 = vcvt.s32.f32 %v274
    %v403 = vcvt.s32.f32 %v275
    %v404 = vcvt.s32.f32 %v276
    %v405 = vcvt.s32.f32 %v277
    %v406 = vcvt.s32.f32 %v278
    %v407 = vcvt.s32.f32 %v279
    %v408 = vcvt.s32.f32 %v280
    %v409 = vcvt.s32.f32 %v281
    %v410 = vcvt.s32.f32 %v282
    %v411 = vcvt.s32.f32 %v283
    %v412 = vcvt.s32.f32 %v284
    %v413 = vcvt.s32.f32 %v285
    %v414 = vcvt.s32.f32 %v286
    %v415 = vcvt.s32.f32 %v287
    %v416 = vcvt.s32.f32 %v288
    %v417 = vcvt.s32.f32 %v289
    %v418 = vcvt.s32.f32 %v290
    %v419 = vcvt.s32.f32 %v291
    %v420 = vcvt.s32.f32 %v292
    %v421 = vcvt.s32.f32 %v293
    %v422 = vcvt.s32.f32 %v294
    %v423 = vcvt.s32.f32 %v295
    %v424 = vcvt.s32.f32 %v296
    %v425 = vcvt.s32.f32 %v297
    %v426 = vcvt.s32.f32 %v298
    %v427 = vcvt.s32.f32 %v299
    %v428 = vcvt.s32.f32 %v300
    %v429 = vcvt.s32.f32 %v301
    %v430 = vcvt.s32.f32 %v302
    %v431 = vcvt.s32.f32 %v303
    %v432 = vcvt.s32.f32 %v304
    %v433 = vcvt.s32.f32 %v305
    %v434 = vcvt.s32.f32 %v306
    %v435 = vcvt.s32.f32 %v307
    %v436 = vcvt.s32.f32 %v308
    %v437 = vcvt.s32.f32 %v309
    %v438 = vcvt.s32.f32 %v310
    %v439 = vcvt.s32.f32 %v311
    %v440 = vcvt.s32.f32 %v312
    %v441 = vcvt.s32.f32 %v313
    %v442 = vcvt.s32.f32 %v314
    %v443 = vcvt.s32.f32 %v315
    %v444 = vcvt.s32.f32 %v316
    %v445 = vcvt.s32.f32 %v317
    %v446 = vcvt.s32.f32 %v318
    %v447 = vcvt.s32.f32 %v319
    %v448 = vcvt.s32.f32 %v320
    %v449 = vcvt.s32.f32 %v321
    %v450 = vcvt.s32.f32 %v322
    %v451 = vcvt.s32.f32 %v323
    %v452 = vcvt.s32.f32 %v324
    %v453 = vcvt.s32.f32 %v325
    %v454 = vcvt.s32.f32 %v326
    %v455 = vcvt.s32.f32 %v327
    %v456 = vcvt.s32.f32 %v328
    %v457 = vcvt.s32.f32 %v329
    %v458 = vcvt.s32.f32 %v330
    %v459 = vcvt.s32.f32 %v331
    %v460 = vcvt.s32.f32 %v332
    %v461 = vcvt.s32.f32 %v333
    %v462 = vcvt.s32.f32 %v334
    %v463 = vcvt.s32.f32 %v335
    %v464 = vcvt.s32.f32 %v336
    %v465 = vcvt.s32.f32 %v337
    %v466 = vcvt.s32.f32 %v338
    %v467 = vcvt.s32.f32 %v339
    %v468 = vcvt.s32.f32 %v340
    %v469 = vcvt.s32.f32 %v341
    %v470 = vcvt.s32.f32 %v342
    %v471 = vcvt.s32.f32 %v343
    %v472 = vcvt.s32.f32 %v344
    %v473 = vcvt.s32.f32 %v345
    %v474 = vcvt.s32.f32 %v346
    %v475 = vcvt.s32.f32 %v347
    %v476 = vcvt.s32.f32 %v348
    %v477 = vcvt.s32.f32 %v349
    %v478 = vcvt.s32.f32 %v350
    %v479 = vcvt.s32.f32 %v351
    %v480 = vcvt.s32.f32 %v352
    %v481 = vcvt.s32.f32 %v353
    %v482 = vcvt.s32.f32 %v354
    %v483 = vcvt.s32.f32 %v355
    %v484 = vcvt.s32.f32 %v356
    %v485 = vcvt.s32.f32 %v357
    %v486 = vcvt.s32.f32 %v358
    %v487 = vcvt.s32.f32 %v359
    %v488 = vcvt.s32.f32 %v360
    %v489 = vcvt.s32.f32 %v361
    %v490 = vcvt.s32.f32 %v362
    %v491 = vcvt.s32.f32 %v363
    %v492 = vcvt.s32.f32 %v364
    %v493 = vcvt.s32.f32 %v365
    %v494 = vcvt.s32.f32 %v366
    %v495 = vcvt.s32.f32 %v367
    %v496 = vcvt.s32.f32 %v368
    %v497 = vcvt.s32.f32 %v369
    %v498 = vcvt.s32.f32 %v370
    %v499 = vcvt.s32.f32 %v371
    %v500 = vcvt.s32.f32 %v372
    %v501 = vcvt.s32.f32 %v373
    %v502 = vcvt.s32.f32 %v374
    %v503 = vcvt.s32.f32 %v375
    %v504 = vcvt.s32.f32 %v376
    %v505 = vcvt.s32.f32 %v377
    %v506 = vcvt.s32.f32 %v378
    %v507 = vcvt.s32.f32 %v379
    %v508 = vcvt.s32.f32 %v380
    %v509 = vcvt.s32.f32 %v381
    %v510 = vcvt.s32.f32 %v382
    %v511 = vcvt.s32.f32 %v383
    %v512 = vcvt.s32.f32 %v384
    %v513 = vcvt.s32.f32 %v385
    %v514 = vcvt.s32.f32 %v386
    %v515 = vcvt.s32.f32 %v387
    %v516 = vcvt.s32.f32 %v388
    %v517 = vcvt.s32.f32 %v389
    %v518 = vcvt.s32.f32 %v390
    %v519 = vcvt.s32.f32 %v391
    %v520 = vcvt.s32.f32 %v392
    %v521 = vpack.c.bf16 %v394, %v393
    %v522 = vpack.c.bf16 %v396, %v395
    %v523 = vpack.c.bf16 %v398, %v397
    %v524 = vpack.c.bf16 %v400, %v399
    %v525 = vpack.c.bf16 %v402, %v401
    %v526 = vpack.c.bf16 %v404, %v403
    %v527 = vpack.c.bf16 %v406, %v405
    %v528 = vpack.c.bf16 %v408, %v407
    %v529 = vpack.c.bf16 %v410, %v409
    %v530 = vpack.c.bf16 %v412, %v411
    %v531 = vpack.c.bf16 %v414, %v413
    %v532 = vpack.c.bf16 %v416, %v415
    %v533 = vpack.c.bf16 %v418, %v417
    %v534 = vpack.c.bf16 %v420, %v419
    %v535 = vpack.c.bf16 %v422, %v421
    %v536 = vpack.c.bf16 %v424, %v423
    %v537 = vpack.c.bf16 %v426, %v425
    %v538 = vpack.c.bf16 %v428, %v427
    %v539 = vpack.c.bf16 %v430, %v429
    %v540 = vpack.c.bf16 %v432, %v431
    %v541 = vpack.c.bf16 %v434, %v433
    %v542 = vpack.c.bf16 %v436, %v435
    %v543 = vpack.c.bf16 %v438, %v437
    %v544 = vpack.c.bf16 %v440, %v439
    %v545 = vpack.c.bf16 %v442, %v441
    %v546 = vpack.c.bf16 %v444, %v443
    %v547 = vpack.c.bf16 %v446, %v445
    %v548 = vpack.c.bf16 %v448, %v447
    %v549 = vpack.c.bf16 %v450, %v449
    %v550 = vpack.c.bf16 %v452, %v451
    %v551 = vpack.c.bf16 %v454, %v453
    %v552 = vpack.c.bf16 %v456, %v455
    %v553 = vpack.c.bf16 %v458, %v457
    %v554 = vpack.c.bf16 %v460, %v459
    %v555 = vpack.c.bf16 %v462, %v461
    %v556 = vpack.c.bf16 %v464, %v463
    %v557 = vpack.c.bf16 %v466, %v465
    %v558 = vpack.c.bf16 %v468, %v467
    %v559 = vpack.c.bf16 %v470, %v469
    %v560 = vpack.c.bf16 %v472, %v471
    %v561 = vpack.c.bf16 %v474, %v473
    %v562 = vpack.c.bf16 %v476, %v475
    %v563 = vpack.c.bf16 %v478, %v477
    %v564 = vpack.c.bf16 %v480, %v479
    %v565 = vpack.c.bf16 %v482, %v481
    %v566 = vpack.c.bf16 %v484, %v483
    %v567 = vpack.c.bf16 %v486, %v485
    %v568 = vpack.c.bf16 %v488, %v487
    %v569 = vpack.c.bf16 %v490, %v489
    %v570 = vpack.c.bf16 %v492, %v491
    %v571 = vpack.c.bf16 %v494, %v493
    %v572 = vpack.c.bf16 %v496, %v495
    %v573 = vpack.c.bf16 %v498, %v497
    %v574 = vpack.c.bf16 %v500, %v499
    %v575 = vpack.c.bf16 %v502, %v501
    %v576 = vpack.c.bf16 %v504, %v503
    %v577 = vpack.c.bf16 %v506, %v505
    %v578 = vpack.c.bf16 %v508, %v507
    %v579 = vpack.c.bf16 %v510, %v509
    %v580 = vpack.c.bf16 %v512, %v511
    %v581 = vpack.c.bf16 %v514, %v513
    %v582 = vpack.c.bf16 %v516, %v515
    %v583 = vpack.c.bf16 %v518, %v517
    %v584 = vpack.c.bf16 %v520, %v519
    %v585 = vld [vmem:[#allocation3] sm:$0xff]
    %v586 = vld [vmem:[#allocation3 + $0x8] sm:$0xff]
    %v587 = vld [vmem:[#allocation3 + $0x10] sm:$0xff]
    %v588 = vld [vmem:[#allocation3 + $0x18] sm:$0xff]
    %v589 = vld [vmem:[#allocation3 + $0x20] sm:$0xff]
    %v590 = vld [vmem:[#allocation3 + $0x28] sm:$0xff]
    %v591 = vld [vmem:[#allocation3 + $0x30] sm:$0xff]
    %v592 = vld [vmem:[#allocation3 + $0x38] sm:$0xff]
    %v593 = vld [vmem:[#allocation3 + $0x40] sm:$0xff]
    %v594 = vld [vmem:[#allocation3 + $0x48] sm:$0xff]
    %v595 = vld [vmem:[#allocation3 + $0x50] sm:$0xff]
    %v596 = vld [vmem:[#allocation3 + $0x58] sm:$0xff]
    %v597 = vld [vmem:[#allocation3 + $0x60] sm:$0xff]
    %v598 = vld [vmem:[#allocation3 + $0x68] sm:$0xff]
    %v599 = vld [vmem:[#allocation3 + $0x70] sm:$0xff]
    %v600 = vld [vmem:[#allocation3 + $0x78] sm:$0xff]
    %v601 = vld [vmem:[%s2] sm:$0xff]
    %v602 = vld [vmem:[%s2 + $0x8] sm:$0xff]
    %v603 = vld [vmem:[%s2 + $0x10] sm:$0xff]
    %v604 = vld [vmem:[%s2 + $0x18] sm:$0xff]
    %606 = vset.pattern.permute.xlu0 0
    %607 = vperm.xlu0 %606, %v601
    %v608 = vpop.permute.xlu0 %607
    %611 = vset.pattern.permute.xlu0 0
    %612 = vperm.xlu0 %611, %v602
    %v613 = vpop.permute.xlu0 %612
    %616 = vset.pattern.permute.xlu0 0
    %617 = vperm.xlu0 %616, %v603
    %v618 = vpop.permute.xlu0 %617
    %621 = vset.pattern.permute.xlu0 0
    %622 = vperm.xlu0 %621, %v604
    %v623 = vpop.permute.xlu0 %622
    %v641 = vunpack.c.l.b16 %v585
    %v642 = vunpack.c.h.b16 %v585
    %v643 = vunpack.c.l.b16 %v586
    %v644 = vunpack.c.h.b16 %v586
    %v645 = vunpack.c.l.b16 %v587
    %v646 = vunpack.c.h.b16 %v587
    %v647 = vunpack.c.l.b16 %v588
    %v648 = vunpack.c.h.b16 %v588
    %v649 = vunpack.c.l.b16 %v589
    %v650 = vunpack.c.h.b16 %v589
    %v651 = vunpack.c.l.b16 %v590
    %v652 = vunpack.c.h.b16 %v590
    %v653 = vunpack.c.l.b16 %v591
    %v654 = vunpack.c.h.b16 %v591
    %v655 = vunpack.c.l.b16 %v592
    %v656 = vunpack.c.h.b16 %v592
    %v657 = vunpack.c.l.b16 %v593
    %v658 = vunpack.c.h.b16 %v593
    %v659 = vunpack.c.l.b16 %v594
    %v660 = vunpack.c.h.b16 %v594
    %v661 = vunpack.c.l.b16 %v595
    %v662 = vunpack.c.h.b16 %v595
    %v663 = vunpack.c.l.b16 %v596
    %v664 = vunpack.c.h.b16 %v596
    %v665 = vunpack.c.l.b16 %v597
    %v666 = vunpack.c.h.b16 %v597
    %v667 = vunpack.c.l.b16 %v598
    %v668 = vunpack.c.h.b16 %v598
    %v669 = vunpack.c.l.b16 %v599
    %v670 = vunpack.c.h.b16 %v599
    %v671 = vunpack.c.l.b16 %v600
    %v672 = vunpack.c.h.b16 %v600
    %v673 = vpack.c.b16 %v649, %v641
    %v674 = vpack.c.b16 %v650, %v642
    %v675 = vpack.c.b16 %v651, %v643
    %v676 = vpack.c.b16 %v652, %v644
    %v677 = vpack.c.b16 %v653, %v645
    %v678 = vpack.c.b16 %v654, %v646
    %v679 = vpack.c.b16 %v655, %v647
    %v680 = vpack.c.b16 %v656, %v648
    %v681 = vpack.c.b16 %v665, %v657
    %v682 = vpack.c.b16 %v666, %v658
    %v683 = vpack.c.b16 %v667, %v659
    %v684 = vpack.c.b16 %v668, %v660
    %v685 = vpack.c.b16 %v669, %v661
    %v686 = vpack.c.b16 %v670, %v662
    %v687 = vpack.c.b16 %v671, %v663
    %v688 = vpack.c.b16 %v672, %v664
    %705 = vmatprep.subr.bf16.mxu0 0
    %706 = vmatpush1.bf16.msra.mxu0 %v521
    %707 = vmatprep.subr.bf16.mxu0 0
    %708 = vmatpush1.bf16.msra.mxu0 %v522
    %709 = vmatprep.subr.bf16.mxu0 0
    %710 = vmatpush1.bf16.msra.mxu0 %v523
    %711 = vmatprep.subr.bf16.mxu0 0
    %712 = vmatpush1.bf16.msra.mxu0 %v524
    %713 = vmatprep.subr.bf16.mxu0 0
    %714 = vmatpush1.bf16.msra.mxu0 %v525
    %715 = vmatprep.subr.bf16.mxu0 0
    %716 = vmatpush1.bf16.msra.mxu0 %v526
    %717 = vmatprep.subr.bf16.mxu0 0
    %718 = vmatpush1.bf16.msra.mxu0 %v527
    %719 = vmatprep.subr.bf16.mxu0 0
    %720 = vmatpush1.bf16.msra.mxu0 %v528
    %721 = vmatprep.subr.bf16.mxu0 0
    %722 = vmatpush1.bf16.msra.mxu0 %v529
    %723 = vmatprep.subr.bf16.mxu0 0
    %724 = vmatpush1.bf16.msra.mxu0 %v530
    %725 = vmatprep.subr.bf16.mxu0 0
    %726 = vmatpush1.bf16.msra.mxu0 %v531
    %727 = vmatprep.subr.bf16.mxu0 0
    %728 = vmatpush1.bf16.msra.mxu0 %v532
    %729 = vmatprep.subr.bf16.mxu0 0
    %730 = vmatpush1.bf16.msra.mxu0 %v533
    %731 = vmatprep.subr.bf16.mxu0 0
    %732 = vmatpush1.bf16.msra.mxu0 %v534
    %733 = vmatprep.subr.bf16.mxu0 0
    %734 = vmatpush1.bf16.msra.mxu0 %v535
    %735 = vmatprep.subr.bf16.mxu0 0
    %736 = vmatpush1.bf16.msra.mxu0 %v536
    %737 = vmatprep.mubr.bf16.mxu0 %v674
    %738 = vmatmul.mubr.bf16.gmra.mrb[0].mxu0 %v673
    %v739 = vpop.f32.mrb[0].mxu0
    %v740 = vadd.f32 %v608, %v739
    %v741 = vpop.f32.mrb[0].mxu0
    %v742 = vpop.f32.mrb[0].mxu0
    %v743 = vadd.f32 %v613, %v742
    %v744 = vpop.f32.mrb[0].mxu0
    %745 = vmatprep.mubr.bf16.mxu0 %v682
    %746 = vmatmul.mubr.bf16.gmra.mrb[0].mxu0 %v681
    %v747 = vpop.f32.mrb[0].mxu0
    %v748 = vadd.f32 %v618, %v747
    %v749 = vpop.f32.mrb[0].mxu0
    %v750 = vpop.f32.mrb[0].mxu0
    %v751 = vadd.f32 %v623, %v750
    %v752 = vpop.f32.mrb[0].mxu0
    %753 = vdwg.mxu0
    %754 = vmatprep.subr.bf16.mxu0 0
    %755 = vmatpush1.bf16.msra.mxu0 %v537
    %756 = vmatprep.subr.bf16.mxu0 0
    %757 = vmatpush1.bf16.msra.mxu0 %v538
    %758 = vmatprep.subr.bf16.mxu0 0
    %759 = vmatpush1.bf16.msra.mxu0 %v539
    %760 = vmatprep.subr.bf16.mxu0 0
    %761 = vmatpush1.bf16.msra.mxu0 %v540
    %762 = vmatprep.subr.bf16.mxu0 0
    %763 = vmatpush1.bf16.msra.mxu0 %v541
    %764 = vmatprep.subr.bf16.mxu0 0
    %765 = vmatpush1.bf16.msra.mxu0 %v542
    %766 = vmatprep.subr.bf16.mxu0 0
    %767 = vmatpush1.bf16.msra.mxu0 %v543
    %768 = vmatprep.subr.bf16.mxu0 0
    %769 = vmatpush1.bf16.msra.mxu0 %v544
    %770 = vmatprep.subr.bf16.mxu0 0
    %771 = vmatpush1.bf16.msra.mxu0 %v545
    %772 = vmatprep.subr.bf16.mxu0 0
    %773 = vmatpush1.bf16.msra.mxu0 %v546
    %774 = vmatprep.subr.bf16.mxu0 0
    %775 = vmatpush1.bf16.msra.mxu0 %v547
    %776 = vmatprep.subr.bf16.mxu0 0
    %777 = vmatpush1.bf16.msra.mxu0 %v548
    %778 = vmatprep.subr.bf16.mxu0 0
    %779 = vmatpush1.bf16.msra.mxu0 %v549
    %780 = vmatprep.subr.bf16.mxu0 0
    %781 = vmatpush1.bf16.msra.mxu0 %v550
    %782 = vmatprep.subr.bf16.mxu0 0
    %783 = vmatpush1.bf16.msra.mxu0 %v551
    %784 = vmatprep.subr.bf16.mxu0 0
    %785 = vmatpush1.bf16.msra.mxu0 %v552
    %786 = vmatprep.mubr.bf16.mxu0 %v676
    %787 = vmatmul.mubr.bf16.gmra.mrb[0].mxu0 %v675
    %v788 = vpop.f32.mrb[0].mxu0
    %v789 = vadd.f32 %v740, %v788
    %v790 = vpop.f32.mrb[0].mxu0
    %v791 = vpop.f32.mrb[0].mxu0
    %v792 = vadd.f32 %v743, %v791
    %v793 = vpop.f32.mrb[0].mxu0
    %794 = vmatprep.mubr.bf16.mxu0 %v684
    %795 = vmatmul.mubr.bf16.gmra.mrb[0].mxu0 %v683
    %v796 = vpop.f32.mrb[0].mxu0
    %v797 = vadd.f32 %v748, %v796
    %v798 = vpop.f32.mrb[0].mxu0
    %v799 = vpop.f32.mrb[0].mxu0
    %v800 = vadd.f32 %v751, %v799
    %v801 = vpop.f32.mrb[0].mxu0
    %802 = vdwg.mxu0
    %803 = vmatprep.subr.bf16.mxu0 0
    %804 = vmatpush1.bf16.msra.mxu0 %v553
    %805 = vmatprep.subr.bf16.mxu0 0
    %806 = vmatpush1.bf16.msra.mxu0 %v554
    %807 = vmatprep.subr.bf16.mxu0 0
    %808 = vmatpush1.bf16.msra.mxu0 %v555
    %809 = vmatprep.subr.bf16.mxu0 0
    %810 = vmatpush1.bf16.msra.mxu0 %v556
    %811 = vmatprep.subr.bf16.mxu0 0
    %812 = vmatpush1.bf16.msra.mxu0 %v557
    %813 = vmatprep.subr.bf16.mxu0 0
    %814 = vmatpush1.bf16.msra.mxu0 %v558
    %815 = vmatprep.subr.bf16.mxu0 0
    %816 = vmatpush1.bf16.msra.mxu0 %v559
    %817 = vmatprep.subr.bf16.mxu0 0
    %818 = vmatpush1.bf16.msra.mxu0 %v560
    %819 = vmatprep.subr.bf16.mxu0 0
    %820 = vmatpush1.bf16.msra.mxu0 %v561
    %821 = vmatprep.subr.bf16.mxu0 0
    %822 = vmatpush1.bf16.msra.mxu0 %v562
    %823 = vmatprep.subr.bf16.mxu0 0
    %824 = vmatpush1.bf16.msra.mxu0 %v563
    %825 = vmatprep.subr.bf16.mxu0 0
    %826 = vmatpush1.bf16.msra.mxu0 %v564
    %827 = vmatprep.subr.bf16.mxu0 0
    %828 = vmatpush1.bf16.msra.mxu0 %v565
    %829 = vmatprep.subr.bf16.mxu0 0
    %830 = vmatpush1.bf16.msra.mxu0 %v566
    %831 = vmatprep.subr.bf16.mxu0 0
    %832 = vmatpush1.bf16.msra.mxu0 %v567
    %833 = vmatprep.subr.bf16.mxu0 0
    %834 = vmatpush1.bf16.msra.mxu0 %v568
    %835 = vmatprep.mubr.bf16.mxu0 %v678
    %836 = vmatmul.mubr.bf16.gmra.mrb[0].mxu0 %v677
    %v837 = vpop.f32.mrb[0].mxu0
    %v838 = vadd.f32 %v789, %v837
    %v839 = vpop.f32.mrb[0].mxu0
    %v840 = vpop.f32.mrb[0].mxu0
    %v841 = vadd.f32 %v792, %v840
    %v842 = vpop.f32.mrb[0].mxu0
    %843 = vmatprep.mubr.bf16.mxu0 %v686
    %844 = vmatmul.mubr.bf16.gmra.mrb[0].mxu0 %v685
    %v845 = vpop.f32.mrb[0].mxu0
    %v846 = vadd.f32 %v797, %v845
    %v847 = vpop.f32.mrb[0].mxu0
    %v848 = vpop.f32.mrb[0].mxu0
    %v849 = vadd.f32 %v800, %v848
    %v850 = vpop.f32.mrb[0].mxu0
    %851 = vdwg.mxu0
    %852 = vmatprep.subr.bf16.mxu0 0
    %853 = vmatpush1.bf16.msra.mxu0 %v569
    %854 = vmatprep.subr.bf16.mxu0 0
    %855 = vmatpush1.bf16.msra.mxu0 %v570
    %856 = vmatprep.subr.bf16.mxu0 0
    %857 = vmatpush1.bf16.msra.mxu0 %v571
    %858 = vmatprep.subr.bf16.mxu0 0
    %859 = vmatpush1.bf16.msra.mxu0 %v572
    %860 = vmatprep.subr.bf16.mxu0 0
    %861 = vmatpush1.bf16.msra.mxu0 %v573
    %862 = vmatprep.subr.bf16.mxu0 0
    %863 = vmatpush1.bf16.msra.mxu0 %v574
    %864 = vmatprep.subr.bf16.mxu0 0
    %865 = vmatpush1.bf16.msra.mxu0 %v575
    %866 = vmatprep.subr.bf16.mxu0 0
    %867 = vmatpush1.bf16.msra.mxu0 %v576
    %868 = vmatprep.subr.bf16.mxu0 0
    %869 = vmatpush1.bf16.msra.mxu0 %v577
    %870 = vmatprep.subr.bf16.mxu0 0
    %871 = vmatpush1.bf16.msra.mxu0 %v578
    %872 = vmatprep.subr.bf16.mxu0 0
    %873 = vmatpush1.bf16.msra.mxu0 %v579
    %874 = vmatprep.subr.bf16.mxu0 0
    %875 = vmatpush1.bf16.msra.mxu0 %v580
    %876 = vmatprep.subr.bf16.mxu0 0
    %877 = vmatpush1.bf16.msra.mxu0 %v581
    %878 = vmatprep.subr.bf16.mxu0 0
    %879 = vmatpush1.bf16.msra.mxu0 %v582
    %880 = vmatprep.subr.bf16.mxu0 0
    %881 = vmatpush1.bf16.msra.mxu0 %v583
    %882 = vmatprep.subr.bf16.mxu0 0
    %883 = vmatpush1.bf16.msra.mxu0 %v584
    %884 = vmatprep.mubr.bf16.mxu0 %v680
    %885 = vmatmul.mubr.bf16.gmra.mrb[0].mxu0 %v679
    %v886 = vpop.f32.mrb[0].mxu0
    %v887 = vadd.f32 %v838, %v886
    %v888 = vpop.f32.mrb[0].mxu0
    %v889 = vpop.f32.mrb[0].mxu0
    %v890 = vadd.f32 %v841, %v889
    %v891 = vpop.f32.mrb[0].mxu0
    %892 = vmatprep.mubr.bf16.mxu0 %v688
    %893 = vmatmul.mubr.bf16.gmra.mrb[0].mxu0 %v687
    %v894 = vpop.f32.mrb[0].mxu0
    %v895 = vadd.f32 %v846, %v894
    %v896 = vpop.f32.mrb[0].mxu0
    %v897 = vpop.f32.mrb[0].mxu0
    %v898 = vadd.f32 %v849, %v897
    %v899 = vpop.f32.mrb[0].mxu0
    %900 = vdwg.mxu0
    %v901 = vmax.f32 %v887, 0.0
    %v902 = vmax.f32 %v890, 0.0
    %v903 = vmax.f32 %v895, 0.0
    %v904 = vmax.f32 %v898, 0.0
    %v905 = vld [vmem:[%s3] sm:$0xff]
    %v906 = vld [vmem:[%s3 + $0x8] sm:$0xff]
    %v907 = vld [vmem:[%s3 + $0x10] sm:$0xff]
    %v908 = vld [vmem:[%s3 + $0x18] sm:$0xff]
    %910 = vset.pattern.permute.xlu0 0
    %911 = vperm.xlu0 %910, %v905
    %v912 = vpop.permute.xlu0 %911
    %915 = vset.pattern.permute.xlu0 0
    %916 = vperm.xlu0 %915, %v906
    %v917 = vpop.permute.xlu0 %916
    %920 = vset.pattern.permute.xlu0 0
    %921 = vperm.xlu0 %920, %v907
    %v922 = vpop.permute.xlu0 %921
    %925 = vset.pattern.permute.xlu0 0
    %926 = vperm.xlu0 %925, %v908
    %v927 = vpop.permute.xlu0 %926
    %v929 = vmul.f32 %v901, %v912
    %v930 = vmul.f32 %v902, %v917
    %v931 = vmul.f32 %v903, %v922
    %v932 = vmul.f32 %v904, %v927
    %v933 = vadd.f32 %v929, %v930
    %v934 = vadd.f32 %v933, %v931
    %v935 = vadd.f32 %v934, %v932
    %v936 = vrot.slane %v935, 4
    %v937 = vadd.f32 %v935, %v936
    %v938 = vrot.slane %v937, 2
    %v939 = vadd.f32 %v937, %v938
    %v940 = vrot.slane %v939, 1
    %v941 = vadd.f32 %v939, %v940
    %v942 = vld [vmem:[#allocation2] sm:$0x1]
    %944 = vset.pattern.permute.xlu0 0
    %945 = vperm.xlu0 %944, %v942
    %v946 = vpop.permute.xlu0 %945
    %v948 = vlaneseq
    %v949 = vshrl.u32 %v948, 7
    %v950 = vsub.s32 0, %v949
    %v951 = vrot.slane %v946, %v950
    %v952 = vadd.f32 %v941, %v951
    %v953 = vsub.f32 0.0, %v952
    %v954 = vmul.f32 %v953, 1.442695
    %v955 = vpow.pop %v954
    %v956 = vadd.f32 %v955, 1.0
    %v957 = vrcp.pop %v956
    %958 = vst [vmem:[#allocation6] sm:$0x1] %v957
    // Predicated region
    $region26: #{tpu_custom_call.1} parent=1 // pred_check
      _
    $region27: #{tpu_custom_call.1} parent=1 // pred_check_branch
      %960 = sbr.rel (0) target = $region29
    $region28: #{tpu_custom_call.1} parent=1 // pred_region
      %s962 = ssub.s32 16, 16
      %963 = vsyncadd [#allocation5], %s962
      %s965 = sshll.u32 [#allocation6], 4
      %s966 = int_to_ptr.vmem [resolvable:$true] %s965
      %968 = dma.vmem_to_hbm [thread:$0]  %s966, 16, %s5, [#allocation5]
    $region29: #{tpu_custom_call.1} parent=1 // pred_fallthru
      _
    // Predicated region
    $region30: #{tpu_custom_call.1} parent=1 // pred_check
      _
    $region31: #{tpu_custom_call.1} parent=1 // pred_check_branch
      %970 = sbr.rel (0) target = $region33
    $region32: #{tpu_custom_call.1} parent=1 // pred_region
      %971 = dma.done [#allocation5], 16
    $region33: #{tpu_custom_call.1} parent=1 // pred_fallthru
      _
    %972 = vsyncpa [#allocation4], 1
    %973 = vsyncpa [#allocation5], 1

</llo_original>
